<compile_context>
chip_gen: v5e
topology: v5e:2x2
jax: 0.10.0
libtpu: 0.0.40
codegen_flags: <defaults>
</compile_context>

<pallas_src>
import jax
import jax.numpy as jnp
from jax.experimental import pallas as pl
from jax.experimental.pallas import tpu as pltpu


_LANE = 128                         # TPU lane width (last-dim tiling unit)
_MIN_PALLAS_BYTES = 2 << 20         # below ~2 MiB total, XLA's fused transpose wins
_MAX_LIVE_TILE_BYTES = 16 << 20     # double-buffered in+out tiles (fits every gen)
_VMEM_HEADROOM_BYTES = 4 << 20      # margin for Pallas internal scratch
_MIN_GRID_STEPS = 8                 # enough steps for prefetch/writeback overlap
_MIN_PIPELINE_TILE = 256            # never shrink tiles below this for pipelining


def _transpose_tile_kernel(x_ref, o_ref):
    # x_ref: (tS, tH) input tile, o_ref: (tH, tS) output tile.
    # Clean 2-D swap -> maps directly onto the XLU transpose path.
    o_ref[...] = x_ref[...].T


def _aligned_divisors(dim, max_tile):
    """128-multiples that evenly divide `dim`, capped at max_tile, largest first."""
    cands = []
    t = _LANE
    hi = min(dim, max_tile)
    while t <= hi:
        if dim % t == 0:
            cands.append(t)
        t += _LANE
    cands.reverse()
    return cands


def _next_smaller(cands, cur, floor):
    """Largest candidate strictly below `cur` but not below `floor` (cands desc)."""
    for t in cands:
        if t < cur and t >= floor:
            return t
    return None


def _choose_tiles(B, S, H, itemsize):
    """Pick (tS, tH) under the VMEM budget with enough grid steps to pipeline.

    Returns None when S or H is not a 128-multiple (ragged tiles would force
    masked partial stores) or the budget cannot be met.
    """
    # Dtype-aware upper bound: narrow dtypes need wider tiles to keep each
    # contiguous DMA row >= ~2 KiB.
    max_tile = 2048 if itemsize <= 2 else 1024
    s_cands = _aligned_divisors(S, max_tile)
    h_cands = _aligned_divisors(H, max_tile)
    if not s_cands or not h_cands:
        return None

    tS, tH = s_cands[0], h_cands[0]

    def live_bytes(ts, th):
        # double-buffered input (ts, th) + output (th, ts) tiles
        return 2 * 2 * ts * th * itemsize

    # 1) Fit the VMEM budget (shrink the larger tile first).
    while live_bytes(tS, tH) > _MAX_LIVE_TILE_BYTES:
        if tS >= tH:
            nxt = _next_smaller(s_cands, tS, _LANE)
            if nxt is not None:
                tS = nxt
                continue
        nxt = _next_smaller(h_cands, tH, _LANE)
        if nxt is not None:
            tH = nxt
            continue
        nxt = _next_smaller(s_cands, tS, _LANE)
        if nxt is not None:
            tS = nxt
            continue
        return None

    # 2) Make sure the grid has enough steps for the pipeline to overlap
    #    input DMA / transpose / output writeback (but keep tiles >= 256).
    def steps(ts, th):
        return B * (S // ts) * (H // th)

    while steps(tS, tH) < _MIN_GRID_STEPS:
        if tS >= tH:
            nxt = _next_smaller(s_cands, tS, _MIN_PIPELINE_TILE)
            if nxt is not None:
                tS = nxt
                continue
            nxt = _next_smaller(h_cands, tH, _MIN_PIPELINE_TILE)
            if nxt is not None:
                tH = nxt
                continue
        else:
            nxt = _next_smaller(h_cands, tH, _MIN_PIPELINE_TILE)
            if nxt is not None:
                tH = nxt
                continue
            nxt = _next_smaller(s_cands, tS, _MIN_PIPELINE_TILE)
            if nxt is not None:
                tS = nxt
                continue
        break  # cannot shrink further; pipeline with what we have

    return tS, tH


def _swap_last_two(x):
    """(B, S, H) -> (B, H, S) via the tiled Pallas kernel (with fallbacks)."""
    B, S, H = x.shape
    itemsize = jnp.dtype(x.dtype).itemsize
    total_bytes = B * S * H * itemsize

    # Tiny inputs: custom-call + per-step overhead swamps <~2 MiB of traffic.
    if total_bytes < _MIN_PALLAS_BYTES:
        return jnp.swapaxes(x, 1, 2)

    tiles = _choose_tiles(B, S, H, itemsize)
    if tiles is None:
        # TODO(synk): non-128-multiple S/H would need masked edge tiles (or a
        # 128-multiple body + remainder split); fall back to XLA's transpose
        # rather than emitting masked vst.msk partial stores.
        return jnp.swapaxes(x, 1, 2)
    tS, tH = tiles

    # Order grid axes so the axis with the most blocks leads: better megacore
    # sharding on v7x's 2 TensorCores (B is often 1-2); a no-op on v5e/v6e.
    counts = (B, S // tS, H // tH)          # logical axes: 0=batch, 1=S-tile, 2=H-tile
    order = sorted(range(3), key=lambda a: -counts[a])
    grid = tuple(counts[a] for a in order)
    pos = [order.index(a) for a in range(3)]  # logical axis -> grid position

    def in_index_map(*g):
        # input block (b, i, j)
        return (g[pos[0]], g[pos[1]], g[pos[2]])

    def out_index_map(*g):
        # output block coordinates are swapped: (b, j, i)
        return (g[pos[0]], g[pos[2]], g[pos[1]])

    # Explicit VMEM budget (double-buffered in + out tiles) + headroom, so the
    # fast path stays available on v5e's 16 MiB default scoped-VMEM limit and
    # stays well inside v7x's 64 MiB physical VMEM.
    live_bytes = 2 * 2 * tS * tH * itemsize
    vmem_limit = live_bytes + _VMEM_HEADROOM_BYTES

    # TODO(synk): if an xprof trace shows exposed output-writeback waits, sweep
    # pipeline_mode=pl.Buffered(3) on the output BlockSpec (and grow vmem_limit
    # by 0.5x live_bytes accordingly).
    return pl.pallas_call(
        _transpose_tile_kernel,
        out_shape=jax.ShapeDtypeStruct((B, H, S), x.dtype),
        grid_spec=pltpu.PrefetchScalarGridSpec(
            num_scalar_prefetch=0,
            grid=grid,
            # Squeeze the batch dim out of the kernel view so the body sees a
            # plain 2-D tile; both tile minor dims (tH in, tS out) are
            # 128-multiples -> unmasked lane-dense loads/stores.
            in_specs=[pl.BlockSpec((pl.Squeezed(), tS, tH), in_index_map)],
            out_specs=pl.BlockSpec((pl.Squeezed(), tH, tS), out_index_map),
        ),
        compiler_params=pltpu.CompilerParams(
            # All axes are independent -> fully parallel grid.
            dimension_semantics=("parallel", "parallel", "parallel"),
            vmem_limit_bytes=vmem_limit,
        ),
        # Pure data movement: tell XLA this custom call is bandwidth-bound so
        # it can schedule neighbors around it.
        cost_estimate=pl.CostEstimate(
            flops=0,
            transcendentals=0,
            bytes_accessed=2 * total_bytes,
        ),
    )(x)


def pallas_transpose(x, shape=(1, 2)):
    """Pallas equivalent of torch.Tensor.transpose(*shape)."""
    ndim = x.ndim
    d0, d1 = sorted(d % ndim for d in shape)
    if d0 == d1:
        return x
    if ndim == 3 and (d0, d1) == (1, 2):
        return _swap_last_two(x)
    # TODO(synk): only the (B, S, H) -> (B, H, S) hot path (how the module is
    # used in the denoise network) is kernelized; other dim pairs / ranks fall
    # back to plain JAX transpose glue.
    perm = list(range(ndim))
    perm[d0], perm[d1] = perm[d1], perm[d0]
    return jnp.transpose(x, perm)


class TransposePallas:
    """Mirror of the PyTorch module; __init__ stores the dim pair."""

    def __init__(self, shape: tuple):
        self.shape = shape

    def __call__(self, x):
        return pallas_transpose(x, self.shape)


if __name__ == "__main__":
    key = jax.random.PRNGKey(0)
    k1, k2, k3 = jax.random.split(key, 3)
    module = TransposePallas(shape=(1, 2))

    # 1) f32 shape large enough for the tiled Pallas path:
    #    (2, 512, 512) -> 2 MiB total; tiles shrink to (256, 256) so the grid
    #    has 8 steps to pipeline.
    B, S, H = 2, 512, 512
    x = jax.random.normal(k1, (B, S, H), dtype=jnp.float32)
    y = jax.block_until_ready(module(x))
    assert y.shape == (B, H, S), y.shape
    assert jnp.array_equal(y, jnp.swapaxes(x, 1, 2)), \
        "mismatch vs reference transpose (f32 pallas path)"

    # 2) bf16, non-power-of-two S (768) exercising dtype-aware / non-square
    #    tiling: tiles (384, 512), grid reordered with 8 steps.
    xb = jax.random.normal(k2, (2, 768, 1024), dtype=jnp.bfloat16)
    yb = jax.block_until_ready(module(xb))
    assert yb.shape == (2, 1024, 768), yb.shape
    assert jnp.array_equal(yb, jnp.swapaxes(xb, 1, 2)), \
        "mismatch vs reference transpose (bf16 pallas path)"

    # 3) Tiny smoke-test shape (routed through the small-input bypass).
    x_small = jax.random.normal(k3, (2, 8, 32), dtype=jnp.float32)
    y_small = jax.block_until_ready(module(x_small))
    assert y_small.shape == (2, 32, 8)
    assert jnp.array_equal(y_small, jnp.swapaxes(x_small, 1, 2)), \
        "mismatch vs reference transpose (small-input bypass)"

    # 4) Negative-dim spelling of the same swap (torch allows negative dims).
    module_neg = TransposePallas(shape=(-1, -2))
    y_neg = jax.block_until_ready(module_neg(x))
    assert jnp.array_equal(y_neg, jnp.swapaxes(x, 1, 2)), \
        "mismatch vs reference transpose (negative dims)"

    print("KERNEL_OK")
</pallas_src>

<mosaic_0001>
module attributes {stable_mosaic.version = 11 : i64} {
  func.func @_transpose_tile_kernel(%arg0: i32, %arg1: i32, %arg2: i32, %arg3: memref<1x256x256xf32, #tpu.memory_space<vmem>>, %arg4: memref<1x256x256xf32, #tpu.memory_space<vmem>>) attributes {dimension_semantics = [#tpu.dimension_semantics<parallel>, #tpu.dimension_semantics<parallel>, #tpu.dimension_semantics<parallel>], iteration_bounds = array<i64: 2, 2, 2>, scalar_prefetch = 0 : i64, scratch_operands = 0 : i64, tpu.core_type = #tpu.core_type<tc>, window_params = [{transform_indices = @transform_0, window_bounds = array<i64: 1, 256, 256>}, {transform_indices = @transform_1, window_bounds = array<i64: 1, 256, 256>}]} {
    %c0 = arith.constant 0 : index
    %c0_0 = arith.constant 0 : index
    %c0_1 = arith.constant 0 : index
    %0 = vector.load %arg3[%c0, %c0_0, %c0_1] : memref<1x256x256xf32, #tpu.memory_space<vmem>>, vector<1x256x256xf32>
    %1 = vector.shape_cast %0 : vector<1x256x256xf32> to vector<256x256xf32>
    %2 = tpu.transpose %1, [1, 0] : vector<256x256xf32> -> vector<256x256xf32>
    %c0_2 = arith.constant 0 : index
    %c0_3 = arith.constant 0 : index
    %c0_4 = arith.constant 0 : index
    %3 = vector.load %arg4[%c0_2, %c0_3, %c0_4] : memref<1x256x256xf32, #tpu.memory_space<vmem>>, vector<1x256x256xf32>
    %4 = vector.shape_cast %3 : vector<1x256x256xf32> to vector<256x256xf32>
    %5 = vector.shape_cast %2 : vector<256x256xf32> to vector<1x256x256xf32>
    tpu.vector_store %arg4[%c0_2, %c0_3, %c0_4], %5 {strides = array<i32>} : memref<1x256x256xf32, #tpu.memory_space<vmem>>, vector<1x256x256xf32>,
    return
  }
  func.func @transform_0(%arg0: i32, %arg1: i32, %arg2: i32) -> (i32, i32, i32) {
    %c0_i32 = arith.constant 0 : i32
    return %arg0, %arg1, %arg2 : i32, i32, i32
  }
  func.func @transform_1(%arg0: i32, %arg1: i32, %arg2: i32) -> (i32, i32, i32) {
    %c0_i32 = arith.constant 0 : i32
    return %arg0, %arg2, %arg1 : i32, i32, i32
  }
}

</mosaic_0001>

<llo_original>
// kernel: tpu_custom_call.1
$region0: #{tpu_custom_call.1}
  #allocation0 [shape = 'u32[]', space=smem, size = 0x4, offset = 0x4, fixed_abs, tag = 'smem constant byte address 0x4 - core index']
  #allocation1 [shape = 'u32[72,128]{1,0:T(1,128)}', space=vmem, size = 0x9000, scoped, tag = 'internal scratch']
  %s0 = inlined_call_operand.hbm [shape: f32[2,512,512], index: 0, kind: input, shape index: {}]
  %s1 = inlined_call_operand.hbm [shape: f32[2,512,512], index: 1, kind: output, shape index: {}]
  %s2 = sld [smem:[#allocation0]]
  $region41: #{tpu_custom_call.1} parent=0
    _
  %s4 = ssub.s32 1, %s2
  %s5 = scalar_select 0, %s4, %s2
  $region1: #{tpu_custom_call.1} parent=0
    #allocation2 [shape = 'u8[524288]{0}', space=vmem, size = 0x80000, scoped, tag = 'input window, operand 0']
    #allocation3 [shape = 's32[2]{0}', space=sflag, size = 0x8, scoped, tag = 'scoped memory for tpu_custom_call.1']
    #allocation4 [shape = 's32[2]{0}', space=sflag, size = 0x8, scoped, tag = 'scoped memory for tpu_custom_call.1']
    #allocation5 [shape = 'u8[524288]{0}', space=vmem, size = 0x80000, scoped, tag = 'output window, operand 0']
    %6 = vsyncpa [#allocation3], 0
    %s7 = scalar_lea.sflag [#allocation3], 1
    %8 = vsyncpa %s7, 0
    %9 = vsyncpa [#allocation4], 0
    %s10 = scalar_lea.sflag [#allocation4], 1
    %11 = vsyncpa %s10, 0
    loop: start=0, step=1, limit=10
    $region2: #{tpu_custom_call.1} parent=1 // loop_pre_header
      _
    $region3: #{tpu_custom_call.1} parent=1 // loop_header
      %s13 = sphi 0, %s17
      %p14 = scmp.ge.s32.totalorder %s13, 10
      %s20 = sphi 0, %s39
      %s21 = sphi 0, %s35
      %s22 = sphi 0, %s31
      %s23 = sphi 0, %s20
      %s24 = sphi 0, %s21
      %s25 = sphi 0, %s22
      %s26 = sphi 0, %s23
      %s27 = sphi 0, %s24
      %s28 = sphi 0, %s25
      %s46 = sphi 0, %s48
      %s49 = sphi 0, %s46
      %s50 = sphi 0, %s49
      %s66 = sphi 0, %s50
      %s76 = sphi 0, %s78
      %s79 = sphi 0, %s76
      %s80 = sphi 0, %s79
      %s96 = sphi 0, %s80
    $region4: #{tpu_custom_call.1} parent=1 // loop_header_branch
      %16 = sbr.rel (%p14) target = $region8
    $region5: #{tpu_custom_call.1} parent=1 // loop_body
      %s18 = ssub.s32 %s13, 1
      %s19 = ssub.s32 %s13, 2
      %s29 = sadd.s32 1, %s22
      %p30 = scmp.ge.s32.totalorder %s29, 2
      %s31 = scalar_select %p30, 0, %s29
      %s32 = sadd.s32 1, %s21
      %s33 = scalar_select %p30, %s32, %s21
      %p34 = scmp.ge.s32.totalorder %s33, 2
      %s35 = scalar_select %p34, 0, %s33
      %s36 = sadd.s32 1, %s20
      %s37 = scalar_select %p34, %s36, %s20
      %p38 = scmp.ge.s32.totalorder %s37, 2
      %s39 = scalar_select %p38, 0, %s37
      %s40 = ssub.s32 %s20, %s39
      %s41 = ssub.s32 %s21, %s35
      %s42 = sor.u32 %s40, %s41
      %s43 = ssub.s32 %s22, %s31
      %s44 = sor.u32 %s42, %s43
      %p45 = scmp.eq.s32.totalorder %s44, 0
      %s47 = sadd.s32 %s46, 1
      %s48 = scalar_select %p45, %s46, %s47
      %p51 = pneg %p45
      %p52 = scmp.eq.s32.totalorder %s13, 7
      %p53 = por %p51, %p52
      %p54 = scmp.ne.s32.totalorder %s46, %s49
      %p55 = scmp.eq.s32.totalorder %s13, 0
      %p56 = por %p54, %p55
      %p57 = scmp.ne.s32.totalorder %s46, %s49
      %p58 = scmp.eq.s32.totalorder %s18, 7
      %p59 = por %p57, %p58
      %p60 = scmp.ne.s32.totalorder %s49, %s50
      %p61 = scmp.eq.s32.totalorder %s18, 0
      %p62 = por %p60, %p61
      %p63 = scmp.ne.s32.totalorder %s49, %s50
      %p64 = scmp.eq.s32.totalorder %s19, 7
      %p65 = por %p63, %p64
      %p67 = scmp.ne.s32.totalorder %s50, %s66
      %p68 = scmp.eq.s32.totalorder %s19, 0
      %p69 = por %p67, %p68
      %s70 = ssub.s32 %s20, %s39
      %s71 = ssub.s32 %s22, %s31
      %s72 = sor.u32 %s70, %s71
      %s73 = ssub.s32 %s21, %s35
      %s74 = sor.u32 %s72, %s73
      %p75 = scmp.eq.s32.totalorder %s74, 0
      %s77 = sadd.s32 %s76, 1
      %s78 = scalar_select %p75, %s76, %s77
      %p81 = pneg %p75
      %p82 = scmp.eq.s32.totalorder %s13, 7
      %p83 = por %p81, %p82
      %p84 = scmp.ne.s32.totalorder %s76, %s79
      %p85 = scmp.eq.s32.totalorder %s13, 0
      %p86 = por %p84, %p85
      %p87 = scmp.ne.s32.totalorder %s76, %s79
      %p88 = scmp.eq.s32.totalorder %s18, 7
      %p89 = por %p87, %p88
      %p90 = scmp.ne.s32.totalorder %s79, %s80
      %p91 = scmp.eq.s32.totalorder %s18, 0
      %p92 = por %p90, %p91
      %p93 = scmp.ne.s32.totalorder %s79, %s80
      %p94 = scmp.eq.s32.totalorder %s19, 7
      %p95 = por %p93, %p94
      %p97 = scmp.ne.s32.totalorder %s80, %s96
      %p98 = scmp.eq.s32.totalorder %s19, 0
      %p99 = por %p97, %p98
      %p100 = scmp.le.s32.totalorder 1, %s13
      %p101 = scmp.lt.s32.totalorder %s13, 9
      %p102 = pnand %p100, %p101
      %p103 = pneg %p102
      // Predicated region
      $region9: #{tpu_custom_call.1} parent=5 // pred_check
        _
      $region10: #{tpu_custom_call.1} parent=5 // pred_check_branch
        %105 = sbr.rel (%p102) target = $region12
      $region11: #{tpu_custom_call.1} parent=5 // pred_region
        %s106 = ssub.s32 %s13, 1
      $region12: #{tpu_custom_call.1} parent=5 // pred_fallthru
        _
      %p107 = scmp.lt.s32.totalorder %s13, 8
      // Predicated region
      $region13: #{tpu_custom_call.1} parent=5 // pred_check
        %p108 = pneg %p107
      $region14: #{tpu_custom_call.1} parent=5 // pred_check_branch
        %110 = sbr.rel (%p108) target = $region16
      $region15: #{tpu_custom_call.1} parent=5 // pred_region
        // Predicated region
        $region17: #{tpu_custom_call.1} parent=15 // pred_check
          %p111 = pneg %p56
        $region18: #{tpu_custom_call.1} parent=15 // pred_check_branch
          %113 = sbr.rel (%p111) target = $region20
        $region19: #{tpu_custom_call.1} parent=15 // pred_region
          %s114 = sand.u32 %s46, 1
          %s115 = scalar_lea.sflag [#allocation3], %s114
          %s116 = sand.u32 %s46, 1
          %s117 = smul.addr %s116, 512
          %s118 = scalar_lea.vmem [#allocation2], %s117
          %s119 = smul.u32 32, %s21
          %s120 = smul.u32 2, %s22
          %122 = vsyncadd %s115, 0
          %s123 = smul.addr %s119, 4
          %s124 = sadd.s32 %s120, %s123
          %s125 = smul.addr %s20, 256
          %s126 = sadd.s32 %s124, %s125
          %s127 = smul.addr %s126, 8
          %s128 = scalar_lea.hbm %s0, %s127
          %s129 = sshll.u32 %s128, 4
          %s130 = int_to_ptr.hbm [resolvable:$true] %s129
          %s131 = sshll.u32 %s118, 4
          %s132 = int_to_ptr.vmem [resolvable:$true] %s131
          %137 = dma.hbm_to_vmem [thread:$0]  %s130, 8192, %s132, %s115, 512, 256, 16
        $region20: #{tpu_custom_call.1} parent=15 // pred_fallthru
          _
      $region16: #{tpu_custom_call.1} parent=5 // pred_fallthru
        _
      %p138 = scmp.le.s32.totalorder 1, %s13
      %p139 = scmp.lt.s32.totalorder %s13, 9
      %p140 = pnand %p138, %p139
      %p141 = pneg %p140
      // Predicated region
      $region21: #{tpu_custom_call.1} parent=5 // pred_check
        _
      $region22: #{tpu_custom_call.1} parent=5 // pred_check_branch
        %143 = sbr.rel (%p140) target = $region24
      $region23: #{tpu_custom_call.1} parent=5 // pred_region
        %s144 = ssub.s32 %s13, 1
        %s145 = sand.u32 %s49, 1
        %s146 = scalar_lea.sflag [#allocation3], %s145
        %s147 = sand.u32 %s49, 1
        %s148 = smul.addr %s147, 512
        %s149 = scalar_lea.vmem [#allocation2], %s148
        // Predicated region
        $region25: #{tpu_custom_call.1} parent=23 // pred_check
          %p150 = pneg %p62
        $region26: #{tpu_custom_call.1} parent=23 // pred_check_branch
          %152 = sbr.rel (%p150) target = $region28
        $region27: #{tpu_custom_call.1} parent=23 // pred_region
          %154 = dma.done %s146, 8192
        $region28: #{tpu_custom_call.1} parent=23 // pred_fallthru
          _
        %s155 = sand.u32 %s49, 1
        %s156 = scalar_lea.sflag [#allocation3], %s155
        %s157 = sand.u32 %s49, 1
        %s158 = smul.addr %s157, 512
        %s159 = scalar_lea.vmem [#allocation2], %s158
        %p160 = pneg %p62
        %p161 = pneg %p59
        %p162 = pneg %p92
        %p163 = pneg %p89
        %s164 = sand.u32 %s79, 1
        %s165 = scalar_lea.sflag [#allocation4], %s164
        %s166 = sand.u32 %s79, 1
        %s167 = smul.addr %s166, 512
        %s168 = scalar_lea.vmem [#allocation5], %s167
        %s169 = smul.u32 32, %s24
        %s170 = smul.u32 2, %s25
        %s171 = smul.u32 32, %s25
        %s172 = smul.u32 2, %s24
        %v173 = vld [vmem:[%s149] sm:$0xff]
        %v174 = vld [vmem:[%s149 + $0x8] sm:$0xff]
        %v175 = vld [vmem:[%s149 + $0x10] sm:$0xff]
        %v176 = vld [vmem:[%s149 + $0x18] sm:$0xff]
        %v177 = vld [vmem:[%s149 + $0x20] sm:$0xff]
        %v178 = vld [vmem:[%s149 + $0x28] sm:$0xff]
        %v179 = vld [vmem:[%s149 + $0x30] sm:$0xff]
        %v180 = vld [vmem:[%s149 + $0x38] sm:$0xff]
        %v181 = vld [vmem:[%s149 + $0x40] sm:$0xff]
        %v182 = vld [vmem:[%s149 + $0x48] sm:$0xff]
        %v183 = vld [vmem:[%s149 + $0x50] sm:$0xff]
        %v184 = vld [vmem:[%s149 + $0x58] sm:$0xff]
        %v185 = vld [vmem:[%s149 + $0x60] sm:$0xff]
        %v186 = vld [vmem:[%s149 + $0x68] sm:$0xff]
        %v187 = vld [vmem:[%s149 + $0x70] sm:$0xff]
        %v188 = vld [vmem:[%s149 + $0x78] sm:$0xff]
        %v189 = vld [vmem:[%s149 + $0x80] sm:$0xff]
        %v190 = vld [vmem:[%s149 + $0x88] sm:$0xff]
        %v191 = vld [vmem:[%s149 + $0x90] sm:$0xff]
        %v192 = vld [vmem:[%s149 + $0x98] sm:$0xff]
        %v193 = vld [vmem:[%s149 + $0xa0] sm:$0xff]
        %v194 = vld [vmem:[%s149 + $0xa8] sm:$0xff]
        %v195 = vld [vmem:[%s149 + $0xb0] sm:$0xff]
        %v196 = vld [vmem:[%s149 + $0xb8] sm:$0xff]
        %v197 = vld [vmem:[%s149 + $0xc0] sm:$0xff]
        %v198 = vld [vmem:[%s149 + $0xc8] sm:$0xff]
        %v199 = vld [vmem:[%s149 + $0xd0] sm:$0xff]
        %v200 = vld [vmem:[%s149 + $0xd8] sm:$0xff]
        %v201 = vld [vmem:[%s149 + $0xe0] sm:$0xff]
        %v202 = vld [vmem:[%s149 + $0xe8] sm:$0xff]
        %v203 = vld [vmem:[%s149 + $0xf0] sm:$0xff]
        %v204 = vld [vmem:[%s149 + $0xf8] sm:$0xff]
        %v205 = vld [vmem:[%s149 + $0x100] sm:$0xff]
        %v206 = vld [vmem:[%s149 + $0x108] sm:$0xff]
        %v207 = vld [vmem:[%s149 + $0x110] sm:$0xff]
        %v208 = vld [vmem:[%s149 + $0x118] sm:$0xff]
        %v209 = vld [vmem:[%s149 + $0x120] sm:$0xff]
        %v210 = vld [vmem:[%s149 + $0x128] sm:$0xff]
        %v211 = vld [vmem:[%s149 + $0x130] sm:$0xff]
        %v212 = vld [vmem:[%s149 + $0x138] sm:$0xff]
        %v213 = vld [vmem:[%s149 + $0x140] sm:$0xff]
        %v214 = vld [vmem:[%s149 + $0x148] sm:$0xff]
        %v215 = vld [vmem:[%s149 + $0x150] sm:$0xff]
        %v216 = vld [vmem:[%s149 + $0x158] sm:$0xff]
        %v217 = vld [vmem:[%s149 + $0x160] sm:$0xff]
        %v218 = vld [vmem:[%s149 + $0x168] sm:$0xff]
        %v219 = vld [vmem:[%s149 + $0x170] sm:$0xff]
        %v220 = vld [vmem:[%s149 + $0x178] sm:$0xff]
        %v221 = vld [vmem:[%s149 + $0x180] sm:$0xff]
        %v222 = vld [vmem:[%s149 + $0x188] sm:$0xff]
        %v223 = vld [vmem:[%s149 + $0x190] sm:$0xff]
        %v224 = vld [vmem:[%s149 + $0x198] sm:$0xff]
        %v225 = vld [vmem:[%s149 + $0x1a0] sm:$0xff]
        %v226 = vld [vmem:[%s149 + $0x1a8] sm:$0xff]
        %v227 = vld [vmem:[%s149 + $0x1b0] sm:$0xff]
        %v228 = vld [vmem:[%s149 + $0x1b8] sm:$0xff]
        %v229 = vld [vmem:[%s149 + $0x1c0] sm:$0xff]
        %v230 = vld [vmem:[%s149 + $0x1c8] sm:$0xff]
        %v231 = vld [vmem:[%s149 + $0x1d0] sm:$0xff]
        %v232 = vld [vmem:[%s149 + $0x1d8] sm:$0xff]
        %v233 = vld [vmem:[%s149 + $0x1e0] sm:$0xff]
        %v234 = vld [vmem:[%s149 + $0x1e8] sm:$0xff]
        %v235 = vld [vmem:[%s149 + $0x1f0] sm:$0xff]
        %v236 = vld [vmem:[%s149 + $0x1f8] sm:$0xff]
        %237 = vxpose.xlu0.b32.start [1/16] %v173, 128
        %238 = vxpose.xlu0.b32.cont [2/16] %v175, 128
        %239 = vxpose.xlu0.b32.cont [3/16] %v177, 128
        %240 = vxpose.xlu0.b32.cont [4/16] %v179, 128
        %241 = vxpose.xlu0.b32.cont [5/16] %v181, 128
        %242 = vxpose.xlu0.b32.cont [6/16] %v183, 128
        %243 = vxpose.xlu0.b32.cont [7/16] %v185, 128
        %244 = vxpose.xlu0.b32.cont [8/16] %v187, 128
        %245 = vxpose.xlu0.b32.cont [9/16] %v189, 128
        %246 = vxpose.xlu0.b32.cont [10/16] %v191, 128
        %247 = vxpose.xlu0.b32.cont [11/16] %v193, 128
        %248 = vxpose.xlu0.b32.cont [12/16] %v195, 128
        %249 = vxpose.xlu0.b32.cont [13/16] %v197, 128
        %250 = vxpose.xlu0.b32.cont [14/16] %v199, 128
        %251 = vxpose.xlu0.b32.cont [15/16] %v201, 128
        %252 = vxpose.xlu0.b32.end [16/16] %v203, 128
        %v253 = vpop.trf.xlu0
        %v254 = vpop.trf.xlu0
        %v255 = vpop.trf.xlu0
        %v256 = vpop.trf.xlu0
        %v257 = vpop.trf.xlu0
        %v258 = vpop.trf.xlu0
        %v259 = vpop.trf.xlu0
        %v260 = vpop.trf.xlu0
        %v261 = vpop.trf.xlu0
        %v262 = vpop.trf.xlu0
        %v263 = vpop.trf.xlu0
        %v264 = vpop.trf.xlu0
        %v265 = vpop.trf.xlu0
        %v266 = vpop.trf.xlu0
        %v267 = vpop.trf.xlu0
        %v268 = vpop.trf.xlu0
        %269 = vxpose.xlu0.b32.start [1/16] %v174, 128
        %270 = vxpose.xlu0.b32.cont [2/16] %v176, 128
        %271 = vxpose.xlu0.b32.cont [3/16] %v178, 128
        %272 = vxpose.xlu0.b32.cont [4/16] %v180, 128
        %273 = vxpose.xlu0.b32.cont [5/16] %v182, 128
        %274 = vxpose.xlu0.b32.cont [6/16] %v184, 128
        %275 = vxpose.xlu0.b32.cont [7/16] %v186, 128
        %276 = vxpose.xlu0.b32.cont [8/16] %v188, 128
        %277 = vxpose.xlu0.b32.cont [9/16] %v190, 128
        %278 = vxpose.xlu0.b32.cont [10/16] %v192, 128
        %279 = vxpose.xlu0.b32.cont [11/16] %v194, 128
        %280 = vxpose.xlu0.b32.cont [12/16] %v196, 128
        %281 = vxpose.xlu0.b32.cont [13/16] %v198, 128
        %282 = vxpose.xlu0.b32.cont [14/16] %v200, 128
        %283 = vxpose.xlu0.b32.cont [15/16] %v202, 128
        %284 = vxpose.xlu0.b32.end [16/16] %v204, 128
        %v285 = vpop.trf.xlu0
        %v286 = vpop.trf.xlu0
        %v287 = vpop.trf.xlu0
        %v288 = vpop.trf.xlu0
        %v289 = vpop.trf.xlu0
        %v290 = vpop.trf.xlu0
        %v291 = vpop.trf.xlu0
        %v292 = vpop.trf.xlu0
        %v293 = vpop.trf.xlu0
        %v294 = vpop.trf.xlu0
        %v295 = vpop.trf.xlu0
        %v296 = vpop.trf.xlu0
        %v297 = vpop.trf.xlu0
        %v298 = vpop.trf.xlu0
        %v299 = vpop.trf.xlu0
        %v300 = vpop.trf.xlu0
        %301 = vxpose.xlu0.b32.start [1/16] %v205, 128
        %302 = vxpose.xlu0.b32.cont [2/16] %v207, 128
        %303 = vxpose.xlu0.b32.cont [3/16] %v209, 128
        %304 = vxpose.xlu0.b32.cont [4/16] %v211, 128
        %305 = vxpose.xlu0.b32.cont [5/16] %v213, 128
        %306 = vxpose.xlu0.b32.cont [6/16] %v215, 128
        %307 = vxpose.xlu0.b32.cont [7/16] %v217, 128
        %308 = vxpose.xlu0.b32.cont [8/16] %v219, 128
        %309 = vxpose.xlu0.b32.cont [9/16] %v221, 128
        %310 = vxpose.xlu0.b32.cont [10/16] %v223, 128
        %311 = vxpose.xlu0.b32.cont [11/16] %v225, 128
        %312 = vxpose.xlu0.b32.cont [12/16] %v227, 128
        %313 = vxpose.xlu0.b32.cont [13/16] %v229, 128
        %314 = vxpose.xlu0.b32.cont [14/16] %v231, 128
        %315 = vxpose.xlu0.b32.cont [15/16] %v233, 128
        %316 = vxpose.xlu0.b32.end [16/16] %v235, 128
        %v317 = vpop.trf.xlu0
        %v318 = vpop.trf.xlu0
        %v319 = vpop.trf.xlu0
        %v320 = vpop.trf.xlu0
        %v321 = vpop.trf.xlu0
        %v322 = vpop.trf.xlu0
        %v323 = vpop.trf.xlu0
        %v324 = vpop.trf.xlu0
        %v325 = vpop.trf.xlu0
        %v326 = vpop.trf.xlu0
        %v327 = vpop.trf.xlu0
        %v328 = vpop.trf.xlu0
        %v329 = vpop.trf.xlu0
        %v330 = vpop.trf.xlu0
        %v331 = vpop.trf.xlu0
        %v332 = vpop.trf.xlu0
        %333 = vxpose.xlu0.b32.start [1/16] %v206, 128
        %334 = vxpose.xlu0.b32.cont [2/16] %v208, 128
        %335 = vxpose.xlu0.b32.cont [3/16] %v210, 128
        %336 = vxpose.xlu0.b32.cont [4/16] %v212, 128
        %337 = vxpose.xlu0.b32.cont [5/16] %v214, 128
        %338 = vxpose.xlu0.b32.cont [6/16] %v216, 128
        %339 = vxpose.xlu0.b32.cont [7/16] %v218, 128
        %340 = vxpose.xlu0.b32.cont [8/16] %v220, 128
        %341 = vxpose.xlu0.b32.cont [9/16] %v222, 128
        %342 = vxpose.xlu0.b32.cont [10/16] %v224, 128
        %343 = vxpose.xlu0.b32.cont [11/16] %v226, 128
        %344 = vxpose.xlu0.b32.cont [12/16] %v228, 128
        %345 = vxpose.xlu0.b32.cont [13/16] %v230, 128
        %346 = vxpose.xlu0.b32.cont [14/16] %v232, 128
        %347 = vxpose.xlu0.b32.cont [15/16] %v234, 128
        %348 = vxpose.xlu0.b32.end [16/16] %v236, 128
        %v349 = vpop.trf.xlu0
        %v350 = vpop.trf.xlu0
        %v351 = vpop.trf.xlu0
        %v352 = vpop.trf.xlu0
        %v353 = vpop.trf.xlu0
        %v354 = vpop.trf.xlu0
        %v355 = vpop.trf.xlu0
        %v356 = vpop.trf.xlu0
        %v357 = vpop.trf.xlu0
        %v358 = vpop.trf.xlu0
        %v359 = vpop.trf.xlu0
        %v360 = vpop.trf.xlu0
        %v361 = vpop.trf.xlu0
        %v362 = vpop.trf.xlu0
        %v363 = vpop.trf.xlu0
        %v364 = vpop.trf.xlu0
        %365 = vst [vmem:[%s168] sm:$0xff] %v253
        %366 = vst [vmem:[%s168 + $0x8] sm:$0xff] %v317
        %367 = vst [vmem:[%s168 + $0x10] sm:$0xff] %v254
        %368 = vst [vmem:[%s168 + $0x18] sm:$0xff] %v318
        %369 = vst [vmem:[%s168 + $0x20] sm:$0xff] %v255
        %370 = vst [vmem:[%s168 + $0x28] sm:$0xff] %v319
        %371 = vst [vmem:[%s168 + $0x30] sm:$0xff] %v256
        %372 = vst [vmem:[%s168 + $0x38] sm:$0xff] %v320
        %373 = vst [vmem:[%s168 + $0x40] sm:$0xff] %v257
        %374 = vst [vmem:[%s168 + $0x48] sm:$0xff] %v321
        %375 = vst [vmem:[%s168 + $0x50] sm:$0xff] %v258
        %376 = vst [vmem:[%s168 + $0x58] sm:$0xff] %v322
        %377 = vst [vmem:[%s168 + $0x60] sm:$0xff] %v259
        %378 = vst [vmem:[%s168 + $0x68] sm:$0xff] %v323
        %379 = vst [vmem:[%s168 + $0x70] sm:$0xff] %v260
        %380 = vst [vmem:[%s168 + $0x78] sm:$0xff] %v324
        %381 = vst [vmem:[%s168 + $0x80] sm:$0xff] %v261
        %382 = vst [vmem:[%s168 + $0x88] sm:$0xff] %v325
        %383 = vst [vmem:[%s168 + $0x90] sm:$0xff] %v262
        %384 = vst [vmem:[%s168 + $0x98] sm:$0xff] %v326
        %385 = vst [vmem:[%s168 + $0xa0] sm:$0xff] %v263
        %386 = vst [vmem:[%s168 + $0xa8] sm:$0xff] %v327
        %387 = vst [vmem:[%s168 + $0xb0] sm:$0xff] %v264
        %388 = vst [vmem:[%s168 + $0xb8] sm:$0xff] %v328
        %389 = vst [vmem:[%s168 + $0xc0] sm:$0xff] %v265
        %390 = vst [vmem:[%s168 + $0xc8] sm:$0xff] %v329
        %391 = vst [vmem:[%s168 + $0xd0] sm:$0xff] %v266
        %392 = vst [vmem:[%s168 + $0xd8] sm:$0xff] %v330
        %393 = vst [vmem:[%s168 + $0xe0] sm:$0xff] %v267
        %394 = vst [vmem:[%s168 + $0xe8] sm:$0xff] %v331
        %395 = vst [vmem:[%s168 + $0xf0] sm:$0xff] %v268
        %396 = vst [vmem:[%s168 + $0xf8] sm:$0xff] %v332
        %397 = vst [vmem:[%s168 + $0x100] sm:$0xff] %v285
        %398 = vst [vmem:[%s168 + $0x108] sm:$0xff] %v349
        %399 = vst [vmem:[%s168 + $0x110] sm:$0xff] %v286
        %400 = vst [vmem:[%s168 + $0x118] sm:$0xff] %v350
        %401 = vst [vmem:[%s168 + $0x120] sm:$0xff] %v287
        %402 = vst [vmem:[%s168 + $0x128] sm:$0xff] %v351
        %403 = vst [vmem:[%s168 + $0x130] sm:$0xff] %v288
        %404 = vst [vmem:[%s168 + $0x138] sm:$0xff] %v352
        %405 = vst [vmem:[%s168 + $0x140] sm:$0xff] %v289
        %406 = vst [vmem:[%s168 + $0x148] sm:$0xff] %v353
        %407 = vst [vmem:[%s168 + $0x150] sm:$0xff] %v290
        %408 = vst [vmem:[%s168 + $0x158] sm:$0xff] %v354
        %409 = vst [vmem:[%s168 + $0x160] sm:$0xff] %v291
        %410 = vst [vmem:[%s168 + $0x168] sm:$0xff] %v355
        %411 = vst [vmem:[%s168 + $0x170] sm:$0xff] %v292
        %412 = vst [vmem:[%s168 + $0x178] sm:$0xff] %v356
        %413 = vst [vmem:[%s168 + $0x180] sm:$0xff] %v293
        %414 = vst [vmem:[%s168 + $0x188] sm:$0xff] %v357
        %415 = vst [vmem:[%s168 + $0x190] sm:$0xff] %v294
        %416 = vst [vmem:[%s168 + $0x198] sm:$0xff] %v358
        %417 = vst [vmem:[%s168 + $0x1a0] sm:$0xff] %v295
        %418 = vst [vmem:[%s168 + $0x1a8] sm:$0xff] %v359
        %419 = vst [vmem:[%s168 + $0x1b0] sm:$0xff] %v296
        %420 = vst [vmem:[%s168 + $0x1b8] sm:$0xff] %v360
        %421 = vst [vmem:[%s168 + $0x1c0] sm:$0xff] %v297
        %422 = vst [vmem:[%s168 + $0x1c8] sm:$0xff] %v361
        %423 = vst [vmem:[%s168 + $0x1d0] sm:$0xff] %v298
        %424 = vst [vmem:[%s168 + $0x1d8] sm:$0xff] %v362
        %425 = vst [vmem:[%s168 + $0x1e0] sm:$0xff] %v299
        %426 = vst [vmem:[%s168 + $0x1e8] sm:$0xff] %v363
        %427 = vst [vmem:[%s168 + $0x1f0] sm:$0xff] %v300
        %428 = vst [vmem:[%s168 + $0x1f8] sm:$0xff] %v364
        %s429 = sand.u32 %s79, 1
        %s430 = scalar_lea.sflag [#allocation4], %s429
        %s431 = sand.u32 %s79, 1
        %s432 = smul.addr %s431, 512
        %s433 = scalar_lea.vmem [#allocation5], %s432
        // Predicated region
        $region29: #{tpu_custom_call.1} parent=23 // pred_check
          %p434 = pneg %p89
        $region30: #{tpu_custom_call.1} parent=23 // pred_check_branch
          %436 = sbr.rel (%p434) target = $region32
        $region31: #{tpu_custom_call.1} parent=23 // pred_region
          %s437 = smul.u32 32, %s25
          %s438 = smul.u32 2, %s24
          %440 = vsyncadd %s430, 0
          %s441 = smul.addr %s437, 4
          %s442 = sadd.s32 %s438, %s441
          %s443 = smul.addr %s23, 256
          %s444 = sadd.s32 %s442, %s443
          %s445 = smul.addr %s444, 8
          %s446 = scalar_lea.hbm %s1, %s445
          %s447 = sshll.u32 %s433, 4
          %s448 = int_to_ptr.vmem [resolvable:$true] %s447
          %s449 = sshll.u32 %s446, 4
          %s450 = int_to_ptr.hbm [resolvable:$true] %s449
          %455 = dma.vmem_to_hbm [thread:$0]  %s448, 8192, %s450, %s430, 256, 512, 16
        $region32: #{tpu_custom_call.1} parent=23 // pred_fallthru
          _
      $region24: #{tpu_custom_call.1} parent=5 // pred_fallthru
        _
      %p456 = scmp.le.s32.totalorder 2, %s13
      // Predicated region
      $region33: #{tpu_custom_call.1} parent=5 // pred_check
        %p457 = pneg %p456
      $region34: #{tpu_custom_call.1} parent=5 // pred_check_branch
        %459 = sbr.rel (%p457) target = $region36
      $region35: #{tpu_custom_call.1} parent=5 // pred_region
        %s460 = ssub.s32 %s13, 2
        // Predicated region
        $region37: #{tpu_custom_call.1} parent=35 // pred_check
          %p461 = pneg %p95
        $region38: #{tpu_custom_call.1} parent=35 // pred_check_branch
          %463 = sbr.rel (%p461) target = $region40
        $region39: #{tpu_custom_call.1} parent=35 // pred_region
          %s464 = sand.u32 %s80, 1
          %s465 = scalar_lea.sflag [#allocation4], %s464
          %s466 = sand.u32 %s80, 1
          %s467 = smul.addr %s466, 512
          %s468 = scalar_lea.vmem [#allocation5], %s467
          %470 = dma.done %s465, 8192
        $region40: #{tpu_custom_call.1} parent=35 // pred_fallthru
          _
      $region36: #{tpu_custom_call.1} parent=5 // pred_fallthru
        _
    $region6: #{tpu_custom_call.1} parent=1 // loop_footer
      %s17 = sadd.s32 1, %s13
    $region7: #{tpu_custom_call.1} parent=1 // loop_footer_branch
      %12 = sbr.rel target = $region3
    $region8: #{tpu_custom_call.1} parent=1 // loop_exit
      _
    %471 = vsyncpa [#allocation3], 1
    %s472 = scalar_lea.sflag [#allocation3], 1
    %473 = vsyncpa %s472, 1
    %474 = vsyncpa [#allocation4], 1
    %s475 = scalar_lea.sflag [#allocation4], 1
    %476 = vsyncpa %s475, 1

</llo_original>
